<compile_context>
chip_gen: v6e
topology: v6e:2x2x1
jax: 0.10.0
libtpu: 0.0.40
codegen_flags: <defaults>
</compile_context>

<pallas_src>
import functools
import math

import jax
import jax.numpy as jnp
from jax import lax
from jax.experimental import pallas as pl
from jax.experimental.pallas import tpu as pltpu

_INV_SQRT2 = 1.0 / math.sqrt(2.0)
_SQRT_2_OVER_PI = math.sqrt(2.0 / math.pi)
_MIB = 1024 * 1024


def _round_up(a, b):
    return (a + b - 1) // b * b


def _cdiv(a, b):
    return (a + b - 1) // b


@functools.lru_cache(maxsize=1)
def _hw_info():
    """Returns (vmem_capacity_bytes, has_two_tensorcores, is_v5) for device 0."""
    kind = ""
    try:
        kind = jax.devices()[0].device_kind.lower()
    except Exception:
        pass
    two_tc = "v7" in kind
    is_v5 = "v5" in kind
    vmem_cap = 64 * _MIB if two_tc else 128 * _MIB
    try:
        info = pltpu.get_tpu_info()
        cap = getattr(info, "vmem_capacity_bytes", None)
        if cap:
            vmem_cap = int(cap)
    except Exception:
        pass
    return vmem_cap, two_tc, is_v5


def _gelu(h, approx):
    if approx:
        # tanh-approx GELU: tanh goes to the EUP slot (hidden under MXU work)
        # instead of lax.erf's long f32 VPU polynomial (VALU-saturating on
        # v6e/v7x at large hidden tiles).
        return 0.5 * h * (1.0 + jnp.tanh(
            _SQRT_2_OVER_PI * (h + 0.044715 * h * h * h)))
    # Exact erf-based GELU (torch.nn.GELU() default).
    return 0.5 * h * (1.0 + lax.erf(h * _INV_SQRT2))


# ----------------------------- kernel bodies ---------------------------------


def _ffn_kernel_onestep(x_ref, w1_ref, b1_ref, w2_ref, b2_ref, o_ref, *, approx):
    # hidden fits a single tile: no accumulation needed at all.
    h = jnp.dot(x_ref[...], w1_ref[...], preferred_element_type=jnp.float32)
    h = _gelu(h + b1_ref[...], approx)
    out = jnp.dot(h.astype(w2_ref.dtype), w2_ref[...],
                  preferred_element_type=jnp.float32) + b2_ref[...]
    o_ref[...] = out.astype(o_ref.dtype)


def _ffn_kernel_direct(x_ref, w1_ref, b1_ref, w2_ref, b2_ref, o_ref, *, approx):
    # f32 output: accumulate directly into o_ref (revisited across the hidden
    # axis), saving the tm*dim*4-byte scratch and one full (tm, dim) copy.
    j = pl.program_id(1)

    @pl.when(j == 0)
    def _init():
        o_ref[...] = jnp.broadcast_to(b2_ref[...], o_ref.shape)

    h = jnp.dot(x_ref[...], w1_ref[...], preferred_element_type=jnp.float32)
    h = _gelu(h + b1_ref[...], approx)
    o_ref[...] += jnp.dot(h.astype(w2_ref.dtype), w2_ref[...],
                          preferred_element_type=jnp.float32)


def _ffn_kernel_acc(x_ref, w1_ref, b1_ref, w2_ref, b2_ref, o_ref, acc_ref, *,
                    approx):
    # Low-precision output with multiple hidden tiles: accumulate in f32
    # scratch, cast once at the last hidden step.
    j = pl.program_id(1)

    @pl.when(j == 0)
    def _init():
        acc_ref[...] = jnp.broadcast_to(
            b2_ref[...].astype(jnp.float32), acc_ref.shape)

    h = jnp.dot(x_ref[...], w1_ref[...], preferred_element_type=jnp.float32)
    h = _gelu(h + b1_ref[...], approx)
    acc_ref[...] += jnp.dot(h.astype(w2_ref.dtype), w2_ref[...],
                            preferred_element_type=jnp.float32)

    @pl.when(j == pl.num_programs(1) - 1)
    def _write():
        o_ref[...] = acc_ref[...].astype(o_ref.dtype)


# ----------------------------- tile selection --------------------------------


def _choose_tiles(M, dim_pad, hidden, in_itemsize, out_itemsize, out_is_f32,
                  vmem_limit, two_tc, tm_req, th_req):
    # --- hidden tile (multiple of 256 when possible; 128-min for tiny FFNs) ---
    if th_req is not None:
        th = max(128, _round_up(th_req, 128))
    elif hidden <= 256:
        th = _round_up(hidden, 128)
    else:
        # Prefer 512 only when it adds no padding beyond the 256 grid.
        th = 512 if _round_up(hidden, 512) == _round_up(hidden, 256) else 256
    h_pad = _round_up(hidden, th)

    budget = vmem_limit - 4 * _MIB  # headroom for compiler-internal scratch

    def max_tm(th_, h_pad_):
        grid1 = h_pad_ // th_
        acc_bytes = 0 if (out_is_f32 or grid1 == 1) else 4
        # x + out double-buffered; f32 accumulator (if any) single-buffered.
        per_tm = dim_pad * (2 * in_itemsize + 2 * out_itemsize + acc_bytes)
        # W1 + W2 tiles double-buffered, plus double-buffered f32 biases.
        fixed = 4 * dim_pad * th_ * in_itemsize + 4 * (th_ + dim_pad) * 4
        return max(8, ((budget - fixed) // per_tm) // 8 * 8)

    tm_cap = max_tm(th, h_pad)
    if th_req is None and th > 256 and tm_cap < 512:
        # Fund a bigger tm by shrinking th, never the other way around:
        # weight-streaming intensity is ~tm FLOP/byte, independent of th.
        th = 256
        h_pad = _round_up(hidden, th)
        tm_cap = max_tm(th, h_pad)

    tm_target = 1024 if tm_req is None else max(8, _round_up(tm_req, 8))
    tm = max(8, min(tm_target, tm_cap, _round_up(M, 8)))
    if two_tc:
        # Keep both v7x TensorCores busy: grid[0] >= 2 whenever M allows.
        tm = max(8, min(tm, _round_up(_cdiv(M, 2), 8)))
    m_pad = _round_up(M, tm)
    return tm, th, m_pad, h_pad


# ------------------------------- wrapper --------------------------------------


@functools.partial(
    jax.jit, static_argnames=("tm", "th", "compute_dtype", "gelu_approx"))
def feed_forward(x, w1, b1, w2, b2, *, tm=None, th=None,
                 compute_dtype=jnp.bfloat16, gelu_approx=None):
    """FeedForward: Linear(dim->hidden) -> GELU -> Linear(hidden->dim).

    x: (B, N, dim); w1: (dim, hidden); b1: (hidden,); w2: (hidden, dim);
    b2: (dim,).  Dropout(p=0.0) layers are the identity and are elided.
    """
    B, N, dim = x.shape
    hidden = w1.shape[1]
    M = B * N
    out_dtype = x.dtype

    vmem_cap, two_tc, is_v5 = _hw_info()
    vmem_limit = min(int(vmem_cap * 0.85), 112 * _MIB)
    if gelu_approx is None:
        # erf hides under v5e's slower MXU; on v6e/v7x it would saturate the
        # VALU slot, so use the (numerically very close) EUP tanh form there.
        gelu_approx = not is_v5

    in_is = jnp.dtype(compute_dtype).itemsize
    out_is = jnp.dtype(out_dtype).itemsize
    out_is_f32 = jnp.dtype(out_dtype) == jnp.dtype(jnp.float32)

    dim_pad = _round_up(dim, 128)
    tm_eff, th_eff, m_pad, h_pad = _choose_tiles(
        M, dim_pad, hidden, in_is, out_is, out_is_f32, vmem_limit, two_tc,
        tm, th)
    grid = (m_pad // tm_eff, h_pad // th_eff)

    # ---- pad & cast operands (zero padding contributes exactly zero) ----
    x2d = x.reshape(M, dim).astype(compute_dtype)
    if (m_pad, dim_pad) != (M, dim):
        x2d = jnp.pad(x2d, ((0, m_pad - M), (0, dim_pad - dim)))

    w1c = w1.astype(compute_dtype)
    w2c = w2.astype(compute_dtype)
    b1f = b1.astype(jnp.float32).reshape(1, hidden)
    b2f = b2.astype(jnp.float32).reshape(1, dim)
    if (dim_pad, h_pad) != (dim, hidden):
        w1c = jnp.pad(w1c, ((0, dim_pad - dim), (0, h_pad - hidden)))
        w2c = jnp.pad(w2c, ((0, h_pad - hidden), (0, dim_pad - dim)))
        b1f = jnp.pad(b1f, ((0, 0), (0, h_pad - hidden)))
        b2f = jnp.pad(b2f, ((0, 0), (0, dim_pad - dim)))

    # ---- pick the kernel variant that avoids the f32 scratch when possible ----
    if grid[1] == 1:
        kernel = functools.partial(_ffn_kernel_onestep, approx=gelu_approx)
        scratch = ()
    elif out_is_f32:
        kernel = functools.partial(_ffn_kernel_direct, approx=gelu_approx)
        scratch = ()
    else:
        kernel = functools.partial(_ffn_kernel_acc, approx=gelu_approx)
        scratch = (pltpu.VMEM((tm_eff, dim_pad), jnp.float32),)

    cost = pl.CostEstimate(
        flops=4 * m_pad * dim_pad * h_pad,                  # two matmuls
        transcendentals=m_pad * h_pad,                      # one per activation
        bytes_accessed=(m_pad * dim_pad * in_is             # x
                        + grid[0] * 2 * dim_pad * h_pad * in_is  # W1+W2 / row tile
                        + m_pad * dim_pad * out_is),        # output
    )

    # TODO(synk): once verified on the deployed jax version, mark the x/out
    # BlockSpecs with pipeline_mode=pl.Buffered(1) (their block only changes
    # per row tile) and sweep pl.Buffered(3) on the weight specs when tm is
    # VMEM-constrained (very large dim on v7x).
    out = pl.pallas_call(
        kernel,
        out_shape=jax.ShapeDtypeStruct((m_pad, dim_pad), out_dtype),
        grid_spec=pltpu.PrefetchScalarGridSpec(
            num_scalar_prefetch=0,
            grid=grid,
            in_specs=[
                pl.BlockSpec((tm_eff, dim_pad), lambda i, j: (i, 0)),   # x rows
                pl.BlockSpec((dim_pad, th_eff), lambda i, j: (0, j)),   # W1 tile
                pl.BlockSpec((1, th_eff), lambda i, j: (0, j)),         # b1 tile
                pl.BlockSpec((th_eff, dim_pad), lambda i, j: (j, 0)),   # W2 tile
                pl.BlockSpec((1, dim_pad), lambda i, j: (0, 0)),        # b2
            ],
            out_specs=pl.BlockSpec((tm_eff, dim_pad), lambda i, j: (i, 0)),
            scratch_shapes=scratch,
        ),
        compiler_params=pltpu.CompilerParams(
            dimension_semantics=("parallel", "arbitrary"),
            vmem_limit_bytes=vmem_limit,
        ),
        cost_estimate=cost,
    )(x2d, w1c, b1f, w2c, b2f)

    return out[:M, :dim].reshape(B, N, dim)


# ------------------------------ test harness ----------------------------------


def init_params(key, dim, hidden_dim, dtype=jnp.float32):
    """nn.Linear-style init (uniform +-1/sqrt(fan_in)); weights stored (in, out)."""
    k1, k2, k3, k4 = jax.random.split(key, 4)
    bound1 = 1.0 / math.sqrt(dim)
    bound2 = 1.0 / math.sqrt(hidden_dim)
    w1 = jax.random.uniform(k1, (dim, hidden_dim), dtype, -bound1, bound1)
    b1 = jax.random.uniform(k2, (hidden_dim,), dtype, -bound1, bound1)
    w2 = jax.random.uniform(k3, (hidden_dim, dim), dtype, -bound2, bound2)
    b2 = jax.random.uniform(k4, (dim,), dtype, -bound2, bound2)
    return w1, b1, w2, b2


def _reference(x, w1, b1, w2, b2):
    """Plain-JAX f32 exact-erf FFN (matches torch FeedForward forward)."""
    B, N, dim = x.shape
    h = x.reshape(-1, dim).astype(jnp.float32) @ w1.astype(jnp.float32) + b1
    h = 0.5 * h * (1.0 + lax.erf(h * _INV_SQRT2))
    y = h @ w2.astype(jnp.float32) + b2
    return y.reshape(B, N, dim).astype(x.dtype)


if __name__ == "__main__":
    key = jax.random.PRNGKey(0)
    kx, kp = jax.random.split(key)

    B, N, DIM = 2, 8, 128
    x = jax.random.normal(kx, (B, N, DIM), dtype=jnp.float32)

    # Case 1: hidden fits a single tile (single-step kernel path).
    HIDDEN1 = 256
    w1, b1, w2, b2 = init_params(kp, DIM, HIDDEN1)
    y = feed_forward(x, w1, b1, w2, b2)
    jax.block_until_ready(y)
    y_ref = _reference(x, w1, b1, w2, b2)
    err1 = float(jnp.max(jnp.abs(y - y_ref)))
    # bf16 matmul inputs with f32 accumulation -> loosened tolerances.
    assert jnp.allclose(y, y_ref, atol=5e-2, rtol=5e-2), err1

    # Case 2: hidden spans several tiles (accumulate-over-hidden path).
    HIDDEN2 = 640
    w1b, b1b, w2b, b2b = init_params(jax.random.PRNGKey(1), DIM, HIDDEN2)
    y2 = feed_forward(x, w1b, b1b, w2b, b2b)
    jax.block_until_ready(y2)
    y2_ref = _reference(x, w1b, b1b, w2b, b2b)
    err2 = float(jnp.max(jnp.abs(y2 - y2_ref)))
    assert jnp.allclose(y2, y2_ref, atol=5e-2, rtol=5e-2), err2

    print("KERNEL_OK")
</pallas_src>

<mosaic_0001>
module attributes {stable_mosaic.version = 11 : i64} {
  func.func @_ffn_kernel_onestep(%arg0: i32, %arg1: i32, %arg2: memref<16x128xbf16, #tpu.memory_space<vmem>>, %arg3: memref<128x256xbf16, #tpu.memory_space<vmem>>, %arg4: memref<1x256xf32, #tpu.memory_space<vmem>>, %arg5: memref<256x128xbf16, #tpu.memory_space<vmem>>, %arg6: memref<1x128xf32, #tpu.memory_space<vmem>>, %arg7: memref<16x128xf32, #tpu.memory_space<vmem>>) attributes {dimension_semantics = [#tpu.dimension_semantics<parallel>, #tpu.dimension_semantics<arbitrary>], iteration_bounds = array<i64: 1, 1>, scalar_prefetch = 0 : i64, scratch_operands = 0 : i64, tpu.core_type = #tpu.core_type<tc>, window_params = [{transform_indices = @transform_0, window_bounds = array<i64: 16, 128>}, {transform_indices = @transform_1, window_bounds = array<i64: 128, 256>}, {transform_indices = @transform_2, window_bounds = array<i64: 1, 256>}, {transform_indices = @transform_3, window_bounds = array<i64: 256, 128>}, {pipeline_mode = #tpu.pipeline_mode<synchronous>, transform_indices = @transform_4, window_bounds = array<i64: 1, 128>}, {transform_indices = @transform_5, window_bounds = array<i64: 16, 128>}]} {
    %c0 = arith.constant 0 : index
    %c0_0 = arith.constant 0 : index
    %0 = vector.load %arg2[%c0, %c0_0] : memref<16x128xbf16, #tpu.memory_space<vmem>>, vector<16x128xbf16>
    %c0_1 = arith.constant 0 : index
    %c0_2 = arith.constant 0 : index
    %1 = vector.load %arg3[%c0_1, %c0_2] : memref<128x256xbf16, #tpu.memory_space<vmem>>, vector<128x256xbf16>
    %cst = arith.constant dense<0.000000e+00> : vector<16x256xf32>
    %2 = tpu.matmul %0, %1, %cst {dimension_numbers = #tpu.dot_dimension_numbers<[1], [0], [0], [1], [0, 0, 1, 1], [], []>} : vector<16x128xbf16>, vector<128x256xbf16>, vector<16x256xf32> -> vector<16x256xf32>
    %c0_3 = arith.constant 0 : index
    %c0_4 = arith.constant 0 : index
    %3 = vector.load %arg4[%c0_3, %c0_4] : memref<1x256xf32, #tpu.memory_space<vmem>>, vector<1x256xf32>
    %4 = vector.broadcast %3 : vector<1x256xf32> to vector<16x256xf32>
    %5 = arith.addf %2, %4 : vector<16x256xf32>
    %cst_5 = arith.constant 5.000000e-01 : f32
    %6 = vector.broadcast %cst_5 : f32 to vector<16x256xf32>
    %7 = arith.mulf %6, %5 : vector<16x256xf32>
    %cst_6 = arith.constant 4.471500e-02 : f32
    %8 = vector.broadcast %cst_6 : f32 to vector<16x256xf32>
    %9 = arith.mulf %8, %5 : vector<16x256xf32>
    %10 = arith.mulf %9, %5 : vector<16x256xf32>
    %11 = arith.mulf %10, %5 : vector<16x256xf32>
    %12 = arith.addf %5, %11 : vector<16x256xf32>
    %cst_7 = arith.constant 0.797884583 : f32
    %13 = vector.broadcast %cst_7 : f32 to vector<16x256xf32>
    %14 = arith.mulf %13, %12 : vector<16x256xf32>
    %15 = math.tanh %14 : vector<16x256xf32>
    %cst_8 = arith.constant 1.000000e+00 : f32
    %16 = vector.broadcast %cst_8 : f32 to vector<16x256xf32>
    %17 = arith.addf %16, %15 : vector<16x256xf32>
    %18 = arith.mulf %7, %17 : vector<16x256xf32>
    %19 = arith.truncf %18 : vector<16x256xf32> to vector<16x256xbf16>
    %c0_9 = arith.constant 0 : index
    %c0_10 = arith.constant 0 : index
    %20 = vector.load %arg5[%c0_9, %c0_10] : memref<256x128xbf16, #tpu.memory_space<vmem>>, vector<256x128xbf16>
    %cst_11 = arith.constant dense<0.000000e+00> : vector<16x128xf32>
    %21 = tpu.matmul %19, %20, %cst_11 {dimension_numbers = #tpu.dot_dimension_numbers<[1], [0], [0], [1], [0, 0, 1, 1], [], []>} : vector<16x256xbf16>, vector<256x128xbf16>, vector<16x128xf32> -> vector<16x128xf32>
    %c0_12 = arith.constant 0 : index
    %c0_13 = arith.constant 0 : index
    %22 = vector.load %arg6[%c0_12, %c0_13] : memref<1x128xf32, #tpu.memory_space<vmem>>, vector<1x128xf32>
    %23 = vector.broadcast %22 : vector<1x128xf32> to vector<16x128xf32>
    %24 = arith.addf %21, %23 : vector<16x128xf32>
    %c0_14 = arith.constant 0 : index
    %c0_15 = arith.constant 0 : index
    %25 = vector.load %arg7[%c0_14, %c0_15] : memref<16x128xf32, #tpu.memory_space<vmem>>, vector<16x128xf32>
    tpu.vector_store %arg7[%c0_14, %c0_15], %24 {strides = array<i32>} : memref<16x128xf32, #tpu.memory_space<vmem>>, vector<16x128xf32>,
    return
  }
  func.func @transform_0(%arg0: i32, %arg1: i32) -> (i32, i32) {
    %c0_i32 = arith.constant 0 : i32
    %c0_i32_0 = arith.constant 0 : i32
    return %arg0, %c0_i32 : i32, i32
  }
  func.func @transform_1(%arg0: i32, %arg1: i32) -> (i32, i32) {
    %c0_i32 = arith.constant 0 : i32
    %c0_i32_0 = arith.constant 0 : i32
    return %c0_i32, %arg1 : i32, i32
  }
  func.func @transform_2(%arg0: i32, %arg1: i32) -> (i32, i32) {
    %c0_i32 = arith.constant 0 : i32
    %c0_i32_0 = arith.constant 0 : i32
    return %c0_i32, %arg1 : i32, i32
  }
  func.func @transform_3(%arg0: i32, %arg1: i32) -> (i32, i32) {
    %c0_i32 = arith.constant 0 : i32
    %c0_i32_0 = arith.constant 0 : i32
    return %arg1, %c0_i32 : i32, i32
  }
  func.func @transform_4(%arg0: i32, %arg1: i32) -> (i32, i32) {
    %c0_i32 = arith.constant 0 : i32
    %c0_i32_0 = arith.constant 0 : i32
    %c0_i32_1 = arith.constant 0 : i32
    return %c0_i32, %c0_i32_0 : i32, i32
  }
  func.func @transform_5(%arg0: i32, %arg1: i32) -> (i32, i32) {
    %c0_i32 = arith.constant 0 : i32
    %c0_i32_0 = arith.constant 0 : i32
    return %arg0, %c0_i32 : i32, i32
  }
}

</mosaic_0001>

<llo_original>
// kernel: feed_forward.1
$region0: #{feed_forward.1}
  #allocation0 [shape = 'u32[]', space=smem, size = 0x4, offset = 0x4, fixed_abs, tag = 'smem constant byte address 0x4 - core index']
  #allocation1 [shape = 'u32[144,128]{1,0:T(1,128)}', space=vmem, size = 0x12000, scoped, tag = 'internal scratch']
  %s0 = inlined_call_operand.vmem [shape: bf16[16,128], index: 0, kind: input, shape index: {}]
  %s1 = inlined_call_operand.vmem [shape: bf16[128,256], index: 1, kind: input, shape index: {}]
  %s2 = inlined_call_operand.vmem [shape: f32[1,256], index: 2, kind: input, shape index: {}]
  %s3 = inlined_call_operand.vmem [shape: bf16[256,128], index: 3, kind: input, shape index: {}]
  %s4 = inlined_call_operand.vmem [shape: f32[1,128], index: 4, kind: input, shape index: {}]
  %s5 = inlined_call_operand.hbm [shape: f32[16,128], index: 5, kind: output, shape index: {}]
  %s6 = sld [smem:[#allocation0]]
  $region30: #{feed_forward.1} parent=0
    _
  %s8 = ssub.s32 1, %s6
  %s9 = scalar_select 0, %s8, %s6
  $region1: #{feed_forward.1} parent=0
    #allocation2 [shape = 'u8[8192]{0}', space=vmem, size = 0x2000, scoped, tag = 'output window, operand 0, single buffered']
    #allocation3 [shape = 's32[1]{0}', space=sflag, size = 0x4, scoped, tag = 'scoped memory for feed_forward.1']
    %10 = vsyncpa [#allocation3], 0
    // Predicated region
    $region2: #{feed_forward.1} parent=1 // pred_check
      _
    $region3: #{feed_forward.1} parent=1 // pred_check_branch
      %12 = sbr.rel (0) target = $region5
    $region4: #{feed_forward.1} parent=1 // pred_region
      _
    $region5: #{feed_forward.1} parent=1 // pred_fallthru
      _
    // Predicated region
    $region6: #{feed_forward.1} parent=1 // pred_check
      _
    $region7: #{feed_forward.1} parent=1 // pred_check_branch
      %14 = sbr.rel (0) target = $region9
    $region8: #{feed_forward.1} parent=1 // pred_region
      _
    $region9: #{feed_forward.1} parent=1 // pred_fallthru
      _
    // Predicated region
    $region10: #{feed_forward.1} parent=1 // pred_check
      _
    $region11: #{feed_forward.1} parent=1 // pred_check_branch
      %16 = sbr.rel (0) target = $region13
    $region12: #{feed_forward.1} parent=1 // pred_region
      _
    $region13: #{feed_forward.1} parent=1 // pred_fallthru
      _
    // Predicated region
    $region14: #{feed_forward.1} parent=1 // pred_check
      _
    $region15: #{feed_forward.1} parent=1 // pred_check_branch
      %18 = sbr.rel (0) target = $region17
    $region16: #{feed_forward.1} parent=1 // pred_region
      _
    $region17: #{feed_forward.1} parent=1 // pred_fallthru
      _
    // Predicated region
    $region18: #{feed_forward.1} parent=1 // pred_check
      _
    $region19: #{feed_forward.1} parent=1 // pred_check_branch
      %20 = sbr.rel (0) target = $region21
    $region20: #{feed_forward.1} parent=1 // pred_region
      _
    $region21: #{feed_forward.1} parent=1 // pred_fallthru
      _
    %v22 = vld [vmem:[%s0] sm:$0xf]
    %v23 = vld [vmem:[%s0 + $0x4] sm:$0xf]
    %v24 = vld [vmem:[%s1] sm:$0xff]
    %v25 = vld [vmem:[%s1 + $0x8] sm:$0xff]
    %v26 = vld [vmem:[%s1 + $0x10] sm:$0xff]
    %v27 = vld [vmem:[%s1 + $0x18] sm:$0xff]
    %v28 = vld [vmem:[%s1 + $0x20] sm:$0xff]
    %v29 = vld [vmem:[%s1 + $0x28] sm:$0xff]
    %v30 = vld [vmem:[%s1 + $0x30] sm:$0xff]
    %v31 = vld [vmem:[%s1 + $0x38] sm:$0xff]
    %v32 = vld [vmem:[%s1 + $0x40] sm:$0xff]
    %v33 = vld [vmem:[%s1 + $0x48] sm:$0xff]
    %v34 = vld [vmem:[%s1 + $0x50] sm:$0xff]
    %v35 = vld [vmem:[%s1 + $0x58] sm:$0xff]
    %v36 = vld [vmem:[%s1 + $0x60] sm:$0xff]
    %v37 = vld [vmem:[%s1 + $0x68] sm:$0xff]
    %v38 = vld [vmem:[%s1 + $0x70] sm:$0xff]
    %v39 = vld [vmem:[%s1 + $0x78] sm:$0xff]
    %v40 = vld [vmem:[%s2] sm:$0x3]
    %v42 = vlaneseq
    %v43 = vshrl.u32 %v42, 7
    %v44 = vsub.s32 0, %v43
    %v45 = vrot.slane %v40, %v44
    %v46 = vlaneseq
    %v47 = vshrl.u32 %v46, 7
    %v48 = vsub.s32 1, %v47
    %v49 = vrot.slane %v40, %v48
    %v54 = vunpack.c.l.b16 %v22
    %v55 = vunpack.c.l.b16 %v23
    %v56 = vpack.c.b16 %v55, %v54
    %v74 = vunpack.c.l.b16 %v24
    %v75 = vunpack.c.h.b16 %v24
    %v76 = vunpack.c.l.b16 %v25
    %v77 = vunpack.c.h.b16 %v25
    %v78 = vunpack.c.l.b16 %v26
    %v79 = vunpack.c.h.b16 %v26
    %v80 = vunpack.c.l.b16 %v27
    %v81 = vunpack.c.h.b16 %v27
    %v82 = vunpack.c.l.b16 %v28
    %v83 = vunpack.c.h.b16 %v28
    %v84 = vunpack.c.l.b16 %v29
    %v85 = vunpack.c.h.b16 %v29
    %v86 = vunpack.c.l.b16 %v30
    %v87 = vunpack.c.h.b16 %v30
    %v88 = vunpack.c.l.b16 %v31
    %v89 = vunpack.c.h.b16 %v31
    %v90 = vunpack.c.l.b16 %v32
    %v91 = vunpack.c.h.b16 %v32
    %v92 = vunpack.c.l.b16 %v33
    %v93 = vunpack.c.h.b16 %v33
    %v94 = vunpack.c.l.b16 %v34
    %v95 = vunpack.c.h.b16 %v34
    %v96 = vunpack.c.l.b16 %v35
    %v97 = vunpack.c.h.b16 %v35
    %v98 = vunpack.c.l.b16 %v36
    %v99 = vunpack.c.h.b16 %v36
    %v100 = vunpack.c.l.b16 %v37
    %v101 = vunpack.c.h.b16 %v37
    %v102 = vunpack.c.l.b16 %v38
    %v103 = vunpack.c.h.b16 %v38
    %v104 = vunpack.c.l.b16 %v39
    %v105 = vunpack.c.h.b16 %v39
    %v106 = vpack.c.b16 %v76, %v74
    %v107 = vpack.c.b16 %v77, %v75
    %v108 = vpack.c.b16 %v80, %v78
    %v109 = vpack.c.b16 %v81, %v79
    %v110 = vpack.c.b16 %v84, %v82
    %v111 = vpack.c.b16 %v85, %v83
    %v112 = vpack.c.b16 %v88, %v86
    %v113 = vpack.c.b16 %v89, %v87
    %v114 = vpack.c.b16 %v92, %v90
    %v115 = vpack.c.b16 %v93, %v91
    %v116 = vpack.c.b16 %v96, %v94
    %v117 = vpack.c.b16 %v97, %v95
    %v118 = vpack.c.b16 %v100, %v98
    %v119 = vpack.c.b16 %v101, %v99
    %v120 = vpack.c.b16 %v104, %v102
    %v121 = vpack.c.b16 %v105, %v103
    %138 = vmatprep.subr.bf16.mxu0 %v121
    %139 = vmatpush1.bf16.msra.mxu0 %v120
    %140 = vmatprep.subr.bf16.mxu0 %v119
    %141 = vmatpush1.bf16.msra.mxu0 %v118
    %142 = vmatprep.subr.bf16.mxu0 %v117
    %143 = vmatpush1.bf16.msra.mxu0 %v116
    %144 = vmatprep.subr.bf16.mxu0 %v115
    %145 = vmatpush1.bf16.msra.mxu0 %v114
    %146 = vmatprep.subr.bf16.mxu0 %v113
    %147 = vmatpush1.bf16.msra.mxu0 %v112
    %148 = vmatprep.subr.bf16.mxu0 %v111
    %149 = vmatpush1.bf16.msra.mxu0 %v110
    %150 = vmatprep.subr.bf16.mxu0 %v109
    %151 = vmatpush1.bf16.msra.mxu0 %v108
    %152 = vmatprep.subr.bf16.mxu0 %v107
    %153 = vmatpush1.bf16.msra.mxu0 %v106
    %154 = vmatprep.subr.bf16.mxu0 0
    %155 = vmatpush2.bf16.msra.mxu0 0
    %156 = vmatprep.subr.bf16.mxu0 0
    %157 = vmatpush2.bf16.msra.mxu0 0
    %158 = vmatprep.subr.bf16.mxu0 0
    %159 = vmatpush2.bf16.msra.mxu0 0
    %160 = vmatprep.subr.bf16.mxu0 0
    %161 = vmatpush2.bf16.msra.mxu0 0
    %162 = vmatprep.subr.bf16.mxu0 0
    %163 = vmatpush2.bf16.msra.mxu0 0
    %164 = vmatprep.subr.bf16.mxu0 0
    %165 = vmatpush2.bf16.msra.mxu0 0
    %166 = vmatprep.subr.bf16.mxu0 0
    %167 = vmatpush2.bf16.msra.mxu0 0
    %168 = vmatprep.subr.bf16.mxu0 0
    %169 = vmatpush2.bf16.msra.mxu0 0
    %170 = vmatprep.mubr.bf16.mxu0 0
    %171 = vmatmul.mubr.bf16.gmra.mxu0 %v56
    %v172 = vpop.f32.mrf.mxu0
    %v173 = vadd.f32 %v45, %v172
    %v174 = vpop.f32.mrf.mxu0
    %v175 = vadd.f32 %v49, %v174
    %v176 = vpop.f32.mrf.mxu0
    %v177 = vadd.f32 %v45, %v176
    %v178 = vpop.f32.mrf.mxu0
    %v179 = vadd.f32 %v49, %v178
    %180 = vdwg.mxu0
    %v181 = vmul.f32 %v173, 0.5
    %v182 = vmul.f32 %v175, 0.5
    %v183 = vmul.f32 %v177, 0.5
    %v184 = vmul.f32 %v179, 0.5
    %v185 = vmul.f32 %v173, 0.044715
    %v186 = vmul.f32 %v175, 0.044715
    %v187 = vmul.f32 %v177, 0.044715
    %v188 = vmul.f32 %v179, 0.044715
    %v189 = vmul.f32 %v185, %v173
    %v190 = vmul.f32 %v186, %v175
    %v191 = vmul.f32 %v187, %v177
    %v192 = vmul.f32 %v188, %v179
    %v193 = vmul.f32 %v189, %v173
    %v194 = vmul.f32 %v190, %v175
    %v195 = vmul.f32 %v191, %v177
    %v196 = vmul.f32 %v192, %v179
    %v197 = vadd.f32 %v173, %v193
    %v198 = vadd.f32 %v175, %v194
    %v199 = vadd.f32 %v177, %v195
    %v200 = vadd.f32 %v179, %v196
    %v201 = vmul.f32 %v197, 0.7978846
    %v202 = vmul.f32 %v198, 0.7978846
    %v203 = vmul.f32 %v199, 0.7978846
    %v204 = vmul.f32 %v200, 0.7978846
    %v205 = vtanh.pop %v201
    %v206 = vtanh.pop %v202
    %v207 = vtanh.pop %v203
    %v208 = vtanh.pop %v204
    %v209 = vadd.f32 %v205, 1.0
    %v210 = vadd.f32 %v206, 1.0
    %v211 = vadd.f32 %v207, 1.0
    %v212 = vadd.f32 %v208, 1.0
    %v213 = vmul.f32 %v181, %v209
    %v214 = vmul.f32 %v182, %v210
    %v215 = vmul.f32 %v183, %v211
    %v216 = vmul.f32 %v184, %v212
    %v217 = vpack.c.bf16 %v215, %v213
    %v218 = vpack.c.bf16 %v216, %v214
    %v219 = vld [vmem:[%s3] sm:$0xf]
    %v220 = vld [vmem:[%s3 + $0x4] sm:$0xf]
    %v221 = vld [vmem:[%s3 + $0x8] sm:$0xf]
    %v222 = vld [vmem:[%s3 + $0xc] sm:$0xf]
    %v223 = vld [vmem:[%s3 + $0x10] sm:$0xf]
    %v224 = vld [vmem:[%s3 + $0x14] sm:$0xf]
    %v225 = vld [vmem:[%s3 + $0x18] sm:$0xf]
    %v226 = vld [vmem:[%s3 + $0x1c] sm:$0xf]
    %v227 = vld [vmem:[%s3 + $0x20] sm:$0xf]
    %v228 = vld [vmem:[%s3 + $0x24] sm:$0xf]
    %v229 = vld [vmem:[%s3 + $0x28] sm:$0xf]
    %v230 = vld [vmem:[%s3 + $0x2c] sm:$0xf]
    %v231 = vld [vmem:[%s3 + $0x30] sm:$0xf]
    %v232 = vld [vmem:[%s3 + $0x34] sm:$0xf]
    %v233 = vld [vmem:[%s3 + $0x38] sm:$0xf]
    %v234 = vld [vmem:[%s3 + $0x3c] sm:$0xf]
    %v235 = vld [vmem:[%s3 + $0x40] sm:$0xf]
    %v236 = vld [vmem:[%s3 + $0x44] sm:$0xf]
    %v237 = vld [vmem:[%s3 + $0x48] sm:$0xf]
    %v238 = vld [vmem:[%s3 + $0x4c] sm:$0xf]
    %v239 = vld [vmem:[%s3 + $0x50] sm:$0xf]
    %v240 = vld [vmem:[%s3 + $0x54] sm:$0xf]
    %v241 = vld [vmem:[%s3 + $0x58] sm:$0xf]
    %v242 = vld [vmem:[%s3 + $0x5c] sm:$0xf]
    %v243 = vld [vmem:[%s3 + $0x60] sm:$0xf]
    %v244 = vld [vmem:[%s3 + $0x64] sm:$0xf]
    %v245 = vld [vmem:[%s3 + $0x68] sm:$0xf]
    %v246 = vld [vmem:[%s3 + $0x6c] sm:$0xf]
    %v247 = vld [vmem:[%s3 + $0x70] sm:$0xf]
    %v248 = vld [vmem:[%s3 + $0x74] sm:$0xf]
    %v249 = vld [vmem:[%s3 + $0x78] sm:$0xf]
    %v250 = vld [vmem:[%s3 + $0x7c] sm:$0xf]
    %v251 = vld [vmem:[%s4] sm:$0x1]
    %v253 = vlaneseq
    %v254 = vshrl.u32 %v253, 7
    %v255 = vsub.s32 0, %v254
    %v256 = vrot.slane %v251, %v255
    %v290 = vunpack.c.l.b16 %v219
    %v291 = vunpack.c.l.b16 %v220
    %v292 = vunpack.c.l.b16 %v221
    %v293 = vunpack.c.l.b16 %v222
    %v294 = vunpack.c.l.b16 %v223
    %v295 = vunpack.c.l.b16 %v224
    %v296 = vunpack.c.l.b16 %v225
    %v297 = vunpack.c.l.b16 %v226
    %v298 = vunpack.c.l.b16 %v227
    %v299 = vunpack.c.l.b16 %v228
    %v300 = vunpack.c.l.b16 %v229
    %v301 = vunpack.c.l.b16 %v230
    %v302 = vunpack.c.l.b16 %v231
    %v303 = vunpack.c.l.b16 %v232
    %v304 = vunpack.c.l.b16 %v233
    %v305 = vunpack.c.l.b16 %v234
    %v306 = vunpack.c.l.b16 %v235
    %v307 = vunpack.c.l.b16 %v236
    %v308 = vunpack.c.l.b16 %v237
    %v309 = vunpack.c.l.b16 %v238
    %v310 = vunpack.c.l.b16 %v239
    %v311 = vunpack.c.l.b16 %v240
    %v312 = vunpack.c.l.b16 %v241
    %v313 = vunpack.c.l.b16 %v242
    %v314 = vunpack.c.l.b16 %v243
    %v315 = vunpack.c.l.b16 %v244
    %v316 = vunpack.c.l.b16 %v245
    %v317 = vunpack.c.l.b16 %v246
    %v318 = vunpack.c.l.b16 %v247
    %v319 = vunpack.c.l.b16 %v248
    %v320 = vunpack.c.l.b16 %v249
    %v321 = vunpack.c.l.b16 %v250
    %v322 = vpack.c.b16 %v291, %v290
    %v323 = vpack.c.b16 %v293, %v292
    %v324 = vpack.c.b16 %v295, %v294
    %v325 = vpack.c.b16 %v297, %v296
    %v326 = vpack.c.b16 %v299, %v298
    %v327 = vpack.c.b16 %v301, %v300
    %v328 = vpack.c.b16 %v303, %v302
    %v329 = vpack.c.b16 %v305, %v304
    %v330 = vpack.c.b16 %v307, %v306
    %v331 = vpack.c.b16 %v309, %v308
    %v332 = vpack.c.b16 %v311, %v310
    %v333 = vpack.c.b16 %v313, %v312
    %v334 = vpack.c.b16 %v315, %v314
    %v335 = vpack.c.b16 %v317, %v316
    %v336 = vpack.c.b16 %v319, %v318
    %v337 = vpack.c.b16 %v321, %v320
    %354 = vmatprep.subr.bf16.mxu0 0
    %355 = vmatpush1.bf16.msra.mxu0 %v329
    %356 = vmatprep.subr.bf16.mxu0 0
    %357 = vmatpush1.bf16.msra.mxu0 %v328
    %358 = vmatprep.subr.bf16.mxu0 0
    %359 = vmatpush1.bf16.msra.mxu0 %v327
    %360 = vmatprep.subr.bf16.mxu0 0
    %361 = vmatpush1.bf16.msra.mxu0 %v326
    %362 = vmatprep.subr.bf16.mxu0 0
    %363 = vmatpush1.bf16.msra.mxu0 %v325
    %364 = vmatprep.subr.bf16.mxu0 0
    %365 = vmatpush1.bf16.msra.mxu0 %v324
    %366 = vmatprep.subr.bf16.mxu0 0
    %367 = vmatpush1.bf16.msra.mxu0 %v323
    %368 = vmatprep.subr.bf16.mxu0 0
    %369 = vmatpush1.bf16.msra.mxu0 %v322
    %370 = vmatprep.subr.bf16.mxu0 0
    %371 = vmatpush2.bf16.msra.mxu0 %v337
    %372 = vmatprep.subr.bf16.mxu0 0
    %373 = vmatpush2.bf16.msra.mxu0 %v336
    %374 = vmatprep.subr.bf16.mxu0 0
    %375 = vmatpush2.bf16.msra.mxu0 %v335
    %376 = vmatprep.subr.bf16.mxu0 0
    %377 = vmatpush2.bf16.msra.mxu0 %v334
    %378 = vmatprep.subr.bf16.mxu0 0
    %379 = vmatpush2.bf16.msra.mxu0 %v333
    %380 = vmatprep.subr.bf16.mxu0 0
    %381 = vmatpush2.bf16.msra.mxu0 %v332
    %382 = vmatprep.subr.bf16.mxu0 0
    %383 = vmatpush2.bf16.msra.mxu0 %v331
    %384 = vmatprep.subr.bf16.mxu0 0
    %385 = vmatpush2.bf16.msra.mxu0 %v330
    %386 = vmatprep.mubr.bf16.mxu0 %v218
    %387 = vmatmul.mubr.bf16.gmra.mxu0 %v217
    %v388 = vpop.f32.mrf.mxu0
    %v389 = vadd.f32 %v256, %v388
    %v390 = vpop.f32.mrf.mxu0
    %v391 = vpop.f32.mrf.mxu0
    %v392 = vadd.f32 %v256, %v391
    %v393 = vpop.f32.mrf.mxu0
    %394 = vdwg.mxu0
    %395 = vst [vmem:[#allocation2] sm:$0xff] %v389
    %396 = vst [vmem:[#allocation2 + $0x8] sm:$0xff] %v392
    // Predicated region
    $region22: #{feed_forward.1} parent=1 // pred_check
      _
    $region23: #{feed_forward.1} parent=1 // pred_check_branch
      %398 = sbr.rel (0) target = $region25
    $region24: #{feed_forward.1} parent=1 // pred_region
      %s400 = ssub.s32 256, 256
      %401 = vsyncadd [#allocation3], %s400
      %s402 = sshll.u32 [#allocation2], 4
      %s403 = int_to_ptr.vmem [resolvable:$true] %s402
      %408 = dma.vmem_to_hbm [thread:$0]  %s403, 256, %s5, [#allocation3], 128, 128, 8
    $region25: #{feed_forward.1} parent=1 // pred_fallthru
      _
    // Predicated region
    $region26: #{feed_forward.1} parent=1 // pred_check
      _
    $region27: #{feed_forward.1} parent=1 // pred_check_branch
      %410 = sbr.rel (0) target = $region29
    $region28: #{feed_forward.1} parent=1 // pred_region
      %411 = dma.done [#allocation3], 256
    $region29: #{feed_forward.1} parent=1 // pred_fallthru
      _
    %412 = vsyncpa [#allocation3], 1

</llo_original>
